<compile_context>
chip_gen: v7x
topology: tpu7x:2x2x1
jax: 0.10.0
libtpu: 0.0.40
codegen_flags: <defaults>
</compile_context>

<pallas_src>
import numpy as np

import jax
import jax.numpy as jnp
from jax.experimental import pallas as pl
from jax.experimental.pallas import tpu as pltpu


# ---------------------------------------------------------------------------
# Kernel
# ---------------------------------------------------------------------------
def _coif2_wavelet_kernel(x_ref,
                          w1_ref, b1_ref, w2_ref, b2_ref,
                          w3_ref, b3_ref, w4_ref, b4_ref,
                          wh_ref, bh_ref,
                          b_out_ref, f_out_ref):
    """Fused trunk + (algebraically pre-fused, concatenated) wavelet heads.

    Everything is (features, batch_tile) in VMEM: lane axis = batch tile (lane-dense).
    Weights may be bf16; MXU accumulation and the bias/ReLU epilogue stay f32.
    """

    def dense_t(w_ref, h, b_ref=None, act=False):
        # (out, in) @ (in, bt) -> (out, bt). Operands cast to the weight dtype
        # (bf16 or f32), f32 accumulation, f32 bias add / ReLU on the VPU.
        y = jnp.dot(w_ref[...], h.astype(w_ref.dtype),
                    preferred_element_type=jnp.float32)
        if b_ref is not None:
            y = y + b_ref[...]
        return jnp.maximum(y, 0.0) if act else y

    h = x_ref[...]                                    # (backcast_length, bt) f32

    # RootBlock trunk (4 x Linear + ReLU).
    h = dense_t(w1_ref, h, b1_ref, act=True)          # backcast_length -> units
    h = dense_t(w2_ref, h, b2_ref, act=True)          # units -> units
    h = dense_t(w3_ref, h, b3_ref, act=True)
    h = dense_t(w4_ref, h, b4_ref, act=True)

    # Single fused head matmul: rows [0:L_back) are the fused backcast head
    # (down_sample @ basis^T @ backcast_linear), the remaining rows the forecast head.
    y = dense_t(wh_ref, h, bh_ref)                    # (L_back + L_fore, bt) f32

    l_back = b_out_ref.shape[0]
    b_out_ref[...] = y[:l_back, :].astype(b_out_ref.dtype)
    f_out_ref[...] = y[l_back:, :].astype(f_out_ref.dtype)


# ---------------------------------------------------------------------------
# Offline parameter fusion (call once, reuse across forward steps)
# ---------------------------------------------------------------------------
def fuse_and_prepare_params(params, compute_dtype=jnp.bfloat16):
    """Fold each fully-linear head chain (theta Linear -> wavelet basis -> down_sample)
    into one (length, units) matrix + (length, 1) bias, concatenate the two heads, and
    cast weights to the MXU compute dtype.  Do this ONCE, not per forward call."""
    gb_t = params["gb"].T
    gf_t = params["gf"].T
    # out^T = (wbd @ gb^T @ wb) @ h^T + (wbd @ gb^T @ bb)
    wb_fused = params["wbd"] @ (gb_t @ params["wb"])     # (L_back, units)
    bb_fused = params["wbd"] @ (gb_t @ params["bb"])     # (L_back, 1)
    wf_fused = params["wfd"] @ (gf_t @ params["wf"])     # (L_fore, units)
    bf_fused = params["wfd"] @ (gf_t @ params["bf"])     # (L_fore, 1)

    cdt = compute_dtype
    return {
        "w1": params["w1"].astype(cdt), "b1": params["b1"],
        "w2": params["w2"].astype(cdt), "b2": params["b2"],
        "w3": params["w3"].astype(cdt), "b3": params["b3"],
        "w4": params["w4"].astype(cdt), "b4": params["b4"],
        "w_head": jnp.concatenate([wb_fused, wf_fused], axis=0).astype(cdt),
        "b_head": jnp.concatenate([bb_fused, bf_fused], axis=0),   # biases stay f32
        "backcast_length": int(params["wbd"].shape[0]),
        "forecast_length": int(params["wfd"].shape[0]),
    }


# ---------------------------------------------------------------------------
# Wrapper
# ---------------------------------------------------------------------------
def _round_up(a, m):
    return ((a + m - 1) // m) * m


def coif2_wavelet_forward(x, prepared, *, batch_tile=2048, feature_first_io=False):
    """Fused Coif2Wavelet forward.

    x: (B, backcast_length) f32, or (backcast_length, B) if feature_first_io=True.
    prepared: output of fuse_and_prepare_params().
    Returns (b, f) with the same layout convention as the input.
    """
    l_back = prepared["backcast_length"]
    l_fore = prepared["forecast_length"]
    units = prepared["w1"].shape[0]

    if feature_first_io:
        # Caller keeps the (features, batch) layout end-to-end: no HBM transposes at all.
        l_in, B = x.shape
        x_t = x
    else:
        # PyTorch-shaped interface: one transpose in / two out (extra HBM round trips).
        # Prefer feature_first_io=True in a surrounding model that can keep this layout.
        B, l_in = x.shape
        x_t = x.T

    # Adaptive batch tiling: big tiles to amortize per-grid-step overhead, but at least
    # two tiles when the batch allows it (so a v7x megacore uses both TensorCores).
    bt = min(batch_tile, _round_up(B, 256))
    n_tiles = pl.cdiv(B, bt)
    if n_tiles < 2 and bt > 256:
        bt = max(256, _round_up(pl.cdiv(B, 2), 256))
        n_tiles = pl.cdiv(B, bt)
    B_pad = n_tiles * bt
    if B_pad != B:
        # Padded columns go through bias+ReLU and produce nonzero garbage; they are
        # sliced off below and never reduced over.
        x_t = jnp.pad(x_t, ((0, 0), (0, B_pad - B)))

    param_vals = [
        prepared["w1"], prepared["b1"], prepared["w2"], prepared["b2"],
        prepared["w3"], prepared["b3"], prepared["w4"], prepared["b4"],
        prepared["w_head"], prepared["b_head"],
    ]

    # Input tiled over the batch (lane) axis; parameters are tiny, full-block, with a
    # constant index_map -> fetched once, not re-DMA'd every grid step.
    in_specs = [pl.BlockSpec((l_in, bt), lambda i: (0, i))]
    for p in param_vals:
        in_specs.append(pl.BlockSpec(p.shape, lambda i: (0, 0)))

    out_specs = [
        pl.BlockSpec((l_back, bt), lambda i: (0, i)),
        pl.BlockSpec((l_fore, bt), lambda i: (0, i)),
    ]

    # Advisory cost estimate (post-fusion: 5 matmuls instead of 10).
    matmul_dims = [(l_in, units), (units, units), (units, units), (units, units),
                   (units, l_back + l_fore)]
    flops = 2 * B_pad * sum(a * b for a, b in matmul_dims)
    bytes_accessed = int(
        x_t.size * x_t.dtype.itemsize
        + sum(int(p.size) * p.dtype.itemsize for p in param_vals)
        + B_pad * (l_back + l_fore) * 4)
    cost = pl.CostEstimate(flops=flops, transcendentals=0, bytes_accessed=bytes_accessed)

    fn = pl.pallas_call(
        _coif2_wavelet_kernel,
        out_shape=(
            jax.ShapeDtypeStruct((l_back, B_pad), jnp.float32),
            jax.ShapeDtypeStruct((l_fore, B_pad), jnp.float32),
        ),
        grid_spec=pltpu.PrefetchScalarGridSpec(
            num_scalar_prefetch=0,
            grid=(n_tiles,),
            in_specs=in_specs,
            out_specs=out_specs,
        ),
        compiler_params=pltpu.CompilerParams(
            dimension_semantics=("parallel",)),
        cost_estimate=cost,
    )
    b_t, f_t = fn(x_t, *param_vals)

    if feature_first_io:
        return b_t[:, :B], f_t[:, :B]
    return b_t[:, :B].T, f_t[:, :B].T


# ---------------------------------------------------------------------------
# Parameter / basis construction
# ---------------------------------------------------------------------------
def make_wavelet_basis(basis_dim):
    """Deterministic (basis_dim, basis_dim) wavelet-style basis with the same
    rolled-column structure as _WaveletGenerator.

    # TODO(synk): exact coif2 phi/psi values require pywt.Wavelet('coif2').wavefun(level=10)
    # + scipy interp1d; a deterministic synthetic scaling/wavelet pair is used instead.
    """
    t = np.linspace(-3.0, 3.0, basis_dim)
    phi = np.exp(-t ** 2)                       # synthetic scaling function
    psi = -t * np.exp(-t ** 2)                  # synthetic mother wavelet
    W = np.zeros((basis_dim, basis_dim), dtype=np.float32)
    for i in range(basis_dim):
        if i < basis_dim // 2:
            W[:, i] = np.roll(phi, i)[:basis_dim]
        else:
            W[:, i] = np.roll(psi, i - basis_dim // 2)[:basis_dim]
    return jnp.asarray(W, dtype=jnp.float32)


def init_params(key, *, units, backcast_length, forecast_length, basis_dim):
    """PyTorch-Linear-style uniform init. Weights are (out, in); biases are (out, 1)."""
    layer_dims = {
        "1":  (units, backcast_length, True),        # fc1
        "2":  (units, units, True),                  # fc2
        "3":  (units, units, True),                  # fc3
        "4":  (units, units, True),                  # fc4
        "b":  (basis_dim, units, True),              # backcast_linear
        "f":  (basis_dim, units, True),              # forecast_linear
        "bd": (backcast_length, basis_dim, False),   # backcast_down_sample (no bias)
        "fd": (forecast_length, basis_dim, False),   # forecast_down_sample (no bias)
    }
    params = {}
    keys = jax.random.split(key, 2 * len(layer_dims))
    for idx, (name, (fan_out, fan_in, has_bias)) in enumerate(layer_dims.items()):
        bound = 1.0 / float(np.sqrt(fan_in))
        wk, bk = keys[2 * idx], keys[2 * idx + 1]
        params[f"w{name}"] = jax.random.uniform(
            wk, (fan_out, fan_in), jnp.float32, -bound, bound)
        if has_bias:
            params[f"b{name}"] = jax.random.uniform(
                bk, (fan_out, 1), jnp.float32, -bound, bound)
    # Fixed (non-trainable) wavelet bases, built identically for both generators.
    params["gb"] = make_wavelet_basis(basis_dim)
    params["gf"] = make_wavelet_basis(basis_dim)
    return params


# ---------------------------------------------------------------------------
# Pure-JAX reference (feature-last, matching the PyTorch module, un-fused)
# ---------------------------------------------------------------------------
def _reference_forward(x, params):
    def lin(h, w, b=None, act=False):
        y = h @ w.T
        if b is not None:
            y = y + b.reshape(1, -1)
        return jnp.maximum(y, 0.0) if act else y

    h = lin(x, params["w1"], params["b1"], act=True)
    h = lin(h, params["w2"], params["b2"], act=True)
    h = lin(h, params["w3"], params["b3"], act=True)
    h = lin(h, params["w4"], params["b4"], act=True)
    b = lin(h, params["wb"], params["bb"])
    f = lin(h, params["wf"], params["bf"])
    b = b @ params["gb"]
    f = f @ params["gf"]
    b = lin(b, params["wbd"])
    f = lin(f, params["wfd"])
    return b, f


if __name__ == "__main__":
    # Small config consistent with the module's constructor defaults.
    units = 32
    backcast_length = 16
    forecast_length = 8
    basis_dim = 32

    key = jax.random.PRNGKey(0)
    kx, kp, kx2 = jax.random.split(key, 3)

    params = init_params(kp, units=units, backcast_length=backcast_length,
                         forecast_length=forecast_length, basis_dim=basis_dim)

    # --- small batch, f32 MXU operands: tight numerical check vs. un-fused reference ---
    x_small = jax.random.normal(kx, (8, backcast_length), jnp.float32)
    prep_f32 = fuse_and_prepare_params(params, compute_dtype=jnp.float32)
    b_out, f_out = coif2_wavelet_forward(x_small, prep_f32)
    jax.block_until_ready((b_out, f_out))
    b_ref, f_ref = _reference_forward(x_small, params)
    assert b_out.shape == (8, backcast_length)
    assert f_out.shape == (8, forecast_length)
    assert jnp.allclose(b_out, b_ref, atol=1e-4, rtol=1e-4)
    assert jnp.allclose(f_out, f_ref, atol=1e-4, rtol=1e-4)

    # --- larger, non-multiple batch, bf16 MXU operands (v6e/v7x fast path) -------------
    # Exercises batch padding and a multi-tile (megacore-friendly) grid.
    x_big = jax.random.normal(kx2, (3000, backcast_length), jnp.float32)
    prep_bf16 = fuse_and_prepare_params(params, compute_dtype=jnp.bfloat16)
    b_big, f_big = coif2_wavelet_forward(x_big, prep_bf16, batch_tile=2048)
    jax.block_until_ready((b_big, f_big))
    b_big_ref, f_big_ref = _reference_forward(x_big, params)
    assert b_big.shape == (3000, backcast_length)
    assert f_big.shape == (3000, forecast_length)
    # bf16 operands trade ~1e-2 relative accuracy for ~3x fewer MXU passes + half the
    # weight DMA bytes; accumulation stays f32.
    assert jnp.allclose(b_big, b_big_ref, atol=0.25, rtol=0.05)
    assert jnp.allclose(f_big, f_big_ref, atol=0.25, rtol=0.05)

    print("KERNEL_OK")
</pallas_src>

<mosaic_0001>
module attributes {stable_mosaic.version = 11 : i64} {
  func.func @_coif2_wavelet_kernel(%arg0: i32, %arg1: memref<16x256xf32, #tpu.memory_space<vmem>>, %arg2: memref<32x16xf32, #tpu.memory_space<vmem>>, %arg3: memref<32x1xf32, #tpu.memory_space<vmem>>, %arg4: memref<32x32xf32, #tpu.memory_space<vmem>>, %arg5: memref<32x1xf32, #tpu.memory_space<vmem>>, %arg6: memref<32x32xf32, #tpu.memory_space<vmem>>, %arg7: memref<32x1xf32, #tpu.memory_space<vmem>>, %arg8: memref<32x32xf32, #tpu.memory_space<vmem>>, %arg9: memref<32x1xf32, #tpu.memory_space<vmem>>, %arg10: memref<24x32xf32, #tpu.memory_space<vmem>>, %arg11: memref<24x1xf32, #tpu.memory_space<vmem>>, %arg12: memref<16x256xf32, #tpu.memory_space<vmem>>, %arg13: memref<8x256xf32, #tpu.memory_space<vmem>>) attributes {dimension_semantics = [#tpu.dimension_semantics<parallel>], iteration_bounds = array<i64: 1>, scalar_prefetch = 0 : i64, scratch_operands = 0 : i64, tpu.core_type = #tpu.core_type<tc>, window_params = [{transform_indices = @transform_0, window_bounds = array<i64: 16, 256>}, {pipeline_mode = #tpu.pipeline_mode<synchronous>, transform_indices = @transform_1, window_bounds = array<i64: 32, 16>}, {pipeline_mode = #tpu.pipeline_mode<synchronous>, transform_indices = @transform_2, window_bounds = array<i64: 32, 1>}, {pipeline_mode = #tpu.pipeline_mode<synchronous>, transform_indices = @transform_3, window_bounds = array<i64: 32, 32>}, {pipeline_mode = #tpu.pipeline_mode<synchronous>, transform_indices = @transform_4, window_bounds = array<i64: 32, 1>}, {pipeline_mode = #tpu.pipeline_mode<synchronous>, transform_indices = @transform_5, window_bounds = array<i64: 32, 32>}, {pipeline_mode = #tpu.pipeline_mode<synchronous>, transform_indices = @transform_6, window_bounds = array<i64: 32, 1>}, {pipeline_mode = #tpu.pipeline_mode<synchronous>, transform_indices = @transform_7, window_bounds = array<i64: 32, 32>}, {pipeline_mode = #tpu.pipeline_mode<synchronous>, transform_indices = @transform_8, window_bounds = array<i64: 32, 1>}, {pipeline_mode = #tpu.pipeline_mode<synchronous>, transform_indices = @transform_9, window_bounds = array<i64: 24, 32>}, {pipeline_mode = #tpu.pipeline_mode<synchronous>, transform_indices = @transform_10, window_bounds = array<i64: 24, 1>}, {transform_indices = @transform_11, window_bounds = array<i64: 16, 256>}, {transform_indices = @transform_12, window_bounds = array<i64: 8, 256>}]} {
    %c0 = arith.constant 0 : index
    %c0_0 = arith.constant 0 : index
    %0 = vector.load %arg1[%c0, %c0_0] : memref<16x256xf32, #tpu.memory_space<vmem>>, vector<16x256xf32>
    %c0_1 = arith.constant 0 : index
    %c0_2 = arith.constant 0 : index
    %1 = vector.load %arg2[%c0_1, %c0_2] : memref<32x16xf32, #tpu.memory_space<vmem>>, vector<32x16xf32>
    %cst = arith.constant dense<0.000000e+00> : vector<32x256xf32>
    %2 = tpu.matmul %1, %0, %cst {dimension_numbers = #tpu.dot_dimension_numbers<[1], [0], [0], [1], [0, 0, 1, 1], [], []>} : vector<32x16xf32>, vector<16x256xf32>, vector<32x256xf32> -> vector<32x256xf32>
    %c0_3 = arith.constant 0 : index
    %c0_4 = arith.constant 0 : index
    %3 = vector.load %arg3[%c0_3, %c0_4] : memref<32x1xf32, #tpu.memory_space<vmem>>, vector<32x1xf32>
    %4 = vector.broadcast %3 : vector<32x1xf32> to vector<32x256xf32>
    %5 = arith.addf %2, %4 : vector<32x256xf32>
    %cst_5 = arith.constant 0.000000e+00 : f32
    %6 = vector.broadcast %cst_5 : f32 to vector<32x256xf32>
    %7 = arith.maximumf %5, %6 : vector<32x256xf32>
    %c0_6 = arith.constant 0 : index
    %c0_7 = arith.constant 0 : index
    %8 = vector.load %arg4[%c0_6, %c0_7] : memref<32x32xf32, #tpu.memory_space<vmem>>, vector<32x32xf32>
    %cst_8 = arith.constant dense<0.000000e+00> : vector<32x256xf32>
    %9 = tpu.matmul %8, %7, %cst_8 {dimension_numbers = #tpu.dot_dimension_numbers<[1], [0], [0], [1], [0, 0, 1, 1], [], []>} : vector<32x32xf32>, vector<32x256xf32>, vector<32x256xf32> -> vector<32x256xf32>
    %c0_9 = arith.constant 0 : index
    %c0_10 = arith.constant 0 : index
    %10 = vector.load %arg5[%c0_9, %c0_10] : memref<32x1xf32, #tpu.memory_space<vmem>>, vector<32x1xf32>
    %11 = vector.broadcast %10 : vector<32x1xf32> to vector<32x256xf32>
    %12 = arith.addf %9, %11 : vector<32x256xf32>
    %cst_11 = arith.constant 0.000000e+00 : f32
    %13 = vector.broadcast %cst_11 : f32 to vector<32x256xf32>
    %14 = arith.maximumf %12, %13 : vector<32x256xf32>
    %c0_12 = arith.constant 0 : index
    %c0_13 = arith.constant 0 : index
    %15 = vector.load %arg6[%c0_12, %c0_13] : memref<32x32xf32, #tpu.memory_space<vmem>>, vector<32x32xf32>
    %cst_14 = arith.constant dense<0.000000e+00> : vector<32x256xf32>
    %16 = tpu.matmul %15, %14, %cst_14 {dimension_numbers = #tpu.dot_dimension_numbers<[1], [0], [0], [1], [0, 0, 1, 1], [], []>} : vector<32x32xf32>, vector<32x256xf32>, vector<32x256xf32> -> vector<32x256xf32>
    %c0_15 = arith.constant 0 : index
    %c0_16 = arith.constant 0 : index
    %17 = vector.load %arg7[%c0_15, %c0_16] : memref<32x1xf32, #tpu.memory_space<vmem>>, vector<32x1xf32>
    %18 = vector.broadcast %17 : vector<32x1xf32> to vector<32x256xf32>
    %19 = arith.addf %16, %18 : vector<32x256xf32>
    %cst_17 = arith.constant 0.000000e+00 : f32
    %20 = vector.broadcast %cst_17 : f32 to vector<32x256xf32>
    %21 = arith.maximumf %19, %20 : vector<32x256xf32>
    %c0_18 = arith.constant 0 : index
    %c0_19 = arith.constant 0 : index
    %22 = vector.load %arg8[%c0_18, %c0_19] : memref<32x32xf32, #tpu.memory_space<vmem>>, vector<32x32xf32>
    %cst_20 = arith.constant dense<0.000000e+00> : vector<32x256xf32>
    %23 = tpu.matmul %22, %21, %cst_20 {dimension_numbers = #tpu.dot_dimension_numbers<[1], [0], [0], [1], [0, 0, 1, 1], [], []>} : vector<32x32xf32>, vector<32x256xf32>, vector<32x256xf32> -> vector<32x256xf32>
    %c0_21 = arith.constant 0 : index
    %c0_22 = arith.constant 0 : index
    %24 = vector.load %arg9[%c0_21, %c0_22] : memref<32x1xf32, #tpu.memory_space<vmem>>, vector<32x1xf32>
    %25 = vector.broadcast %24 : vector<32x1xf32> to vector<32x256xf32>
    %26 = arith.addf %23, %25 : vector<32x256xf32>
    %cst_23 = arith.constant 0.000000e+00 : f32
    %27 = vector.broadcast %cst_23 : f32 to vector<32x256xf32>
    %28 = arith.maximumf %26, %27 : vector<32x256xf32>
    %c0_24 = arith.constant 0 : index
    %c0_25 = arith.constant 0 : index
    %29 = vector.load %arg10[%c0_24, %c0_25] : memref<24x32xf32, #tpu.memory_space<vmem>>, vector<24x32xf32>
    %cst_26 = arith.constant dense<0.000000e+00> : vector<24x256xf32>
    %30 = tpu.matmul %29, %28, %cst_26 {dimension_numbers = #tpu.dot_dimension_numbers<[1], [0], [0], [1], [0, 0, 1, 1], [], []>} : vector<24x32xf32>, vector<32x256xf32>, vector<24x256xf32> -> vector<24x256xf32>
    %c0_27 = arith.constant 0 : index
    %c0_28 = arith.constant 0 : index
    %31 = vector.load %arg11[%c0_27, %c0_28] : memref<24x1xf32, #tpu.memory_space<vmem>>, vector<24x1xf32>
    %32 = vector.broadcast %31 : vector<24x1xf32> to vector<24x256xf32>
    %33 = arith.addf %30, %32 : vector<24x256xf32>
    %34 = vector.extract_strided_slice %33 {offsets = [0, 0], sizes = [16, 256], strides = [1, 1]} : vector<24x256xf32> to vector<16x256xf32>
    %c0_29 = arith.constant 0 : index
    %c0_30 = arith.constant 0 : index
    %35 = vector.load %arg12[%c0_29, %c0_30] : memref<16x256xf32, #tpu.memory_space<vmem>>, vector<16x256xf32>
    tpu.vector_store %arg12[%c0_29, %c0_30], %34 {strides = array<i32>} : memref<16x256xf32, #tpu.memory_space<vmem>>, vector<16x256xf32>,
    %36 = vector.extract_strided_slice %33 {offsets = [16, 0], sizes = [8, 256], strides = [1, 1]} : vector<24x256xf32> to vector<8x256xf32>
    %c0_31 = arith.constant 0 : index
    %c0_32 = arith.constant 0 : index
    %37 = vector.load %arg13[%c0_31, %c0_32] : memref<8x256xf32, #tpu.memory_space<vmem>>, vector<8x256xf32>
    tpu.vector_store %arg13[%c0_31, %c0_32], %36 {strides = array<i32>} : memref<8x256xf32, #tpu.memory_space<vmem>>, vector<8x256xf32>,
    return
  }
  func.func @transform_0(%arg0: i32) -> (i32, i32) {
    %c0_i32 = arith.constant 0 : i32
    %c0_i32_0 = arith.constant 0 : i32
    return %c0_i32, %arg0 : i32, i32
  }
  func.func @transform_1(%arg0: i32) -> (i32, i32) {
    %c0_i32 = arith.constant 0 : i32
    %c0_i32_0 = arith.constant 0 : i32
    %c0_i32_1 = arith.constant 0 : i32
    return %c0_i32, %c0_i32_0 : i32, i32
  }
  func.func @transform_2(%arg0: i32) -> (i32, i32) {
    %c0_i32 = arith.constant 0 : i32
    %c0_i32_0 = arith.constant 0 : i32
    %c0_i32_1 = arith.constant 0 : i32
    return %c0_i32, %c0_i32_0 : i32, i32
  }
  func.func @transform_3(%arg0: i32) -> (i32, i32) {
    %c0_i32 = arith.constant 0 : i32
    %c0_i32_0 = arith.constant 0 : i32
    %c0_i32_1 = arith.constant 0 : i32
    return %c0_i32, %c0_i32_0 : i32, i32
  }
  func.func @transform_4(%arg0: i32) -> (i32, i32) {
    %c0_i32 = arith.constant 0 : i32
    %c0_i32_0 = arith.constant 0 : i32
    %c0_i32_1 = arith.constant 0 : i32
    return %c0_i32, %c0_i32_0 : i32, i32
  }
  func.func @transform_5(%arg0: i32) -> (i32, i32) {
    %c0_i32 = arith.constant 0 : i32
    %c0_i32_0 = arith.constant 0 : i32
    %c0_i32_1 = arith.constant 0 : i32
    return %c0_i32, %c0_i32_0 : i32, i32
  }
  func.func @transform_6(%arg0: i32) -> (i32, i32) {
    %c0_i32 = arith.constant 0 : i32
    %c0_i32_0 = arith.constant 0 : i32
    %c0_i32_1 = arith.constant 0 : i32
    return %c0_i32, %c0_i32_0 : i32, i32
  }
  func.func @transform_7(%arg0: i32) -> (i32, i32) {
    %c0_i32 = arith.constant 0 : i32
    %c0_i32_0 = arith.constant 0 : i32
    %c0_i32_1 = arith.constant 0 : i32
    return %c0_i32, %c0_i32_0 : i32, i32
  }
  func.func @transform_8(%arg0: i32) -> (i32, i32) {
    %c0_i32 = arith.constant 0 : i32
    %c0_i32_0 = arith.constant 0 : i32
    %c0_i32_1 = arith.constant 0 : i32
    return %c0_i32, %c0_i32_0 : i32, i32
  }
  func.func @transform_9(%arg0: i32) -> (i32, i32) {
    %c0_i32 = arith.constant 0 : i32
    %c0_i32_0 = arith.constant 0 : i32
    %c0_i32_1 = arith.constant 0 : i32
    return %c0_i32, %c0_i32_0 : i32, i32
  }
  func.func @transform_10(%arg0: i32) -> (i32, i32) {
    %c0_i32 = arith.constant 0 : i32
    %c0_i32_0 = arith.constant 0 : i32
    %c0_i32_1 = arith.constant 0 : i32
    return %c0_i32, %c0_i32_0 : i32, i32
  }
  func.func @transform_11(%arg0: i32) -> (i32, i32) {
    %c0_i32 = arith.constant 0 : i32
    %c0_i32_0 = arith.constant 0 : i32
    return %c0_i32, %arg0 : i32, i32
  }
  func.func @transform_12(%arg0: i32) -> (i32, i32) {
    %c0_i32 = arith.constant 0 : i32
    %c0_i32_0 = arith.constant 0 : i32
    return %c0_i32, %arg0 : i32, i32
  }
}

</mosaic_0001>

<llo_original>
// kernel: tpu_custom_call.1
$region0: #{tpu_custom_call.1}
  #allocation0 [shape = 'u32[]', space=smem, size = 0x4, offset = 0x4, fixed_abs, tag = 'smem constant byte address 0x4 - core index']
  #allocation1 [shape = 'u32[144,128]{1,0:T(1,128)}', space=vmem, size = 0x12000, scoped, tag = 'internal scratch']
  %s0 = inlined_call_operand.vmem [shape: f32[16,256], index: 0, kind: input, shape index: {}]
  %s1 = inlined_call_operand.vmem [shape: f32[32,16], index: 1, kind: input, shape index: {}]
  %s2 = inlined_call_operand.vmem [shape: f32[32,1], index: 2, kind: input, shape index: {}]
  %s3 = inlined_call_operand.vmem [shape: f32[32,32], index: 3, kind: input, shape index: {}]
  %s4 = inlined_call_operand.vmem [shape: f32[32,1], index: 4, kind: input, shape index: {}]
  %s5 = inlined_call_operand.vmem [shape: f32[32,32], index: 5, kind: input, shape index: {}]
  %s6 = inlined_call_operand.vmem [shape: f32[32,1], index: 6, kind: input, shape index: {}]
  %s7 = inlined_call_operand.vmem [shape: f32[32,32], index: 7, kind: input, shape index: {}]
  %s8 = inlined_call_operand.vmem [shape: f32[32,1], index: 8, kind: input, shape index: {}]
  %s9 = inlined_call_operand.vmem [shape: f32[24,32], index: 9, kind: input, shape index: {}]
  %s10 = inlined_call_operand.vmem [shape: f32[24,1], index: 10, kind: input, shape index: {}]
  %s11 = inlined_call_operand.hbm [shape: f32[16,256], index: 11, kind: output, shape index: {0}]
  %s12 = inlined_call_operand.hbm [shape: f32[8,256], index: 12, kind: output, shape index: {1}]
  %13 = xla_tuple %s11, %s12
  %s14 = sld [smem:[#allocation0]]
  $region62: #{tpu_custom_call.1} parent=0
    _
  %s16 = ssub.s32 1, %s14
  %s17 = scalar_select 0, %s16, %s14
  $region1: #{tpu_custom_call.1} parent=0
    #allocation2 [shape = 'u8[16384]{0}', space=vmem, size = 0x4000, scoped, tag = 'output window, operand 0, single buffered']
    #allocation3 [shape = 's32[1]{0}', space=sflag, size = 0x4, scoped, tag = 'scoped memory for tpu_custom_call.1']
    #allocation4 [shape = 'u8[8192]{0}', space=vmem, size = 0x2000, scoped, tag = 'output window, operand 1, single buffered']
    #allocation5 [shape = 's32[1]{0}', space=sflag, size = 0x4, scoped, tag = 'scoped memory for tpu_custom_call.1']
    %18 = vsyncpa [#allocation3], 0
    %19 = vsyncpa [#allocation5], 0
    // Predicated region
    $region2: #{tpu_custom_call.1} parent=1 // pred_check
      _
    $region3: #{tpu_custom_call.1} parent=1 // pred_check_branch
      %21 = sbr.rel (0) target = $region5
    $region4: #{tpu_custom_call.1} parent=1 // pred_region
      _
    $region5: #{tpu_custom_call.1} parent=1 // pred_fallthru
      _
    // Predicated region
    $region6: #{tpu_custom_call.1} parent=1 // pred_check
      _
    $region7: #{tpu_custom_call.1} parent=1 // pred_check_branch
      %23 = sbr.rel (0) target = $region9
    $region8: #{tpu_custom_call.1} parent=1 // pred_region
      _
    $region9: #{tpu_custom_call.1} parent=1 // pred_fallthru
      _
    // Predicated region
    $region10: #{tpu_custom_call.1} parent=1 // pred_check
      _
    $region11: #{tpu_custom_call.1} parent=1 // pred_check_branch
      %25 = sbr.rel (0) target = $region13
    $region12: #{tpu_custom_call.1} parent=1 // pred_region
      _
    $region13: #{tpu_custom_call.1} parent=1 // pred_fallthru
      _
    // Predicated region
    $region14: #{tpu_custom_call.1} parent=1 // pred_check
      _
    $region15: #{tpu_custom_call.1} parent=1 // pred_check_branch
      %27 = sbr.rel (0) target = $region17
    $region16: #{tpu_custom_call.1} parent=1 // pred_region
      _
    $region17: #{tpu_custom_call.1} parent=1 // pred_fallthru
      _
    // Predicated region
    $region18: #{tpu_custom_call.1} parent=1 // pred_check
      _
    $region19: #{tpu_custom_call.1} parent=1 // pred_check_branch
      %29 = sbr.rel (0) target = $region21
    $region20: #{tpu_custom_call.1} parent=1 // pred_region
      _
    $region21: #{tpu_custom_call.1} parent=1 // pred_fallthru
      _
    // Predicated region
    $region22: #{tpu_custom_call.1} parent=1 // pred_check
      _
    $region23: #{tpu_custom_call.1} parent=1 // pred_check_branch
      %31 = sbr.rel (0) target = $region25
    $region24: #{tpu_custom_call.1} parent=1 // pred_region
      _
    $region25: #{tpu_custom_call.1} parent=1 // pred_fallthru
      _
    // Predicated region
    $region26: #{tpu_custom_call.1} parent=1 // pred_check
      _
    $region27: #{tpu_custom_call.1} parent=1 // pred_check_branch
      %33 = sbr.rel (0) target = $region29
    $region28: #{tpu_custom_call.1} parent=1 // pred_region
      _
    $region29: #{tpu_custom_call.1} parent=1 // pred_fallthru
      _
    // Predicated region
    $region30: #{tpu_custom_call.1} parent=1 // pred_check
      _
    $region31: #{tpu_custom_call.1} parent=1 // pred_check_branch
      %35 = sbr.rel (0) target = $region33
    $region32: #{tpu_custom_call.1} parent=1 // pred_region
      _
    $region33: #{tpu_custom_call.1} parent=1 // pred_fallthru
      _
    // Predicated region
    $region34: #{tpu_custom_call.1} parent=1 // pred_check
      _
    $region35: #{tpu_custom_call.1} parent=1 // pred_check_branch
      %37 = sbr.rel (0) target = $region37
    $region36: #{tpu_custom_call.1} parent=1 // pred_region
      _
    $region37: #{tpu_custom_call.1} parent=1 // pred_fallthru
      _
    // Predicated region
    $region38: #{tpu_custom_call.1} parent=1 // pred_check
      _
    $region39: #{tpu_custom_call.1} parent=1 // pred_check_branch
      %39 = sbr.rel (0) target = $region41
    $region40: #{tpu_custom_call.1} parent=1 // pred_region
      _
    $region41: #{tpu_custom_call.1} parent=1 // pred_fallthru
      _
    // Predicated region
    $region42: #{tpu_custom_call.1} parent=1 // pred_check
      _
    $region43: #{tpu_custom_call.1} parent=1 // pred_check_branch
      %41 = sbr.rel (0) target = $region45
    $region44: #{tpu_custom_call.1} parent=1 // pred_region
      _
    $region45: #{tpu_custom_call.1} parent=1 // pred_fallthru
      _
    %v42 = vld [vmem:[%s0] sm:$0xff]
    %v43 = vld [vmem:[%s0 + $0x8] sm:$0xff]
    %v44 = vld [vmem:[%s0 + $0x10] sm:$0xff]
    %v45 = vld [vmem:[%s0 + $0x18] sm:$0xff]
    %v46 = vld [vmem:[%s1] sm:$0xff]
    %v47 = vld [vmem:[%s1 + $0x8] sm:$0xff]
    %v48 = vld [vmem:[%s1 + $0x10] sm:$0xff]
    %v49 = vld [vmem:[%s1 + $0x18] sm:$0xff]
    %v50 = vld [vmem:[%s2] sm:$0xff]
    %v51 = vld [vmem:[%s2 + $0x8] sm:$0xff]
    %v52 = vld [vmem:[%s2 + $0x10] sm:$0xff]
    %v53 = vld [vmem:[%s2 + $0x18] sm:$0xff]
    %55 = vset.pattern.permute.xlu0 0
    %56 = vperm.xlu0 %55, %v50
    %v57 = vpop.permute.xlu0 %56
    %60 = vset.pattern.permute.xlu0 0
    %61 = vperm.xlu0 %60, %v51
    %v62 = vpop.permute.xlu0 %61
    %65 = vset.pattern.permute.xlu0 0
    %66 = vperm.xlu0 %65, %v52
    %v67 = vpop.permute.xlu0 %66
    %70 = vset.pattern.permute.xlu0 0
    %71 = vperm.xlu0 %70, %v53
    %v72 = vpop.permute.xlu0 %71
    %vm74 = vcmask 130048
    %v76 = vsel %vm74, %v46, 0
    %v79 = vsel %vm74, %v47, 0
    %v82 = vsel %vm74, %v48, 0
    %v85 = vsel %vm74, %v49, 0
    %87 = vmatprep.subr.mxu0 %v43
    %88 = vmatpush1.msra.mxu0 %v42
    %89 = vmatprep.subr.mxu0 %v45
    %90 = vmatpush1.msra.mxu0 %v44
    %91 = vmatprep.subr.mxu0 0.0
    %92 = vmatpush1.msra.mxu0 0.0
    %93 = vmatprep.subr.mxu0 0.0
    %94 = vmatpush1.msra.mxu0 0.0
    %95 = vmatprep.subr.mxu0 0.0
    %96 = vmatpush1.msra.mxu0 0.0
    %97 = vmatprep.subr.mxu0 0.0
    %98 = vmatpush1.msra.mxu0 0.0
    %99 = vmatprep.subr.mxu0 0.0
    %100 = vmatpush1.msra.mxu0 0.0
    %101 = vmatprep.subr.mxu0 0.0
    %102 = vmatpush1.msra.mxu0 0.0
    %103 = vmatprep.subr.mxu0 0.0
    %104 = vmatpush1.msra.mxu0 0.0
    %105 = vmatprep.subr.mxu0 0.0
    %106 = vmatpush1.msra.mxu0 0.0
    %107 = vmatprep.subr.mxu0 0.0
    %108 = vmatpush1.msra.mxu0 0.0
    %109 = vmatprep.subr.mxu0 0.0
    %110 = vmatpush1.msra.mxu0 0.0
    %111 = vmatprep.subr.mxu0 0.0
    %112 = vmatpush1.msra.mxu0 0.0
    %113 = vmatprep.subr.mxu0 0.0
    %114 = vmatpush1.msra.mxu0 0.0
    %115 = vmatprep.subr.mxu0 0.0
    %116 = vmatpush1.msra.mxu0 0.0
    %117 = vmatprep.subr.mxu0 0.0
    %118 = vmatpush1.msra.mxu0 0.0
    %119 = vmatprep.subr.mxu0 0.0
    %120 = vmatpush1.msra.mxu0 0.0
    %121 = vmatprep.subr.mxu0 0.0
    %122 = vmatpush1.msra.mxu0 0.0
    %123 = vmatprep.subr.mxu0 0.0
    %124 = vmatpush1.msra.mxu0 0.0
    %125 = vmatprep.subr.mxu0 0.0
    %126 = vmatpush1.msra.mxu0 0.0
    %127 = vmatprep.subr.mxu0 0.0
    %128 = vmatpush1.msra.mxu0 0.0
    %129 = vmatprep.subr.mxu0 0.0
    %130 = vmatpush1.msra.mxu0 0.0
    %131 = vmatprep.subr.mxu0 0.0
    %132 = vmatpush1.msra.mxu0 0.0
    %133 = vmatprep.subr.mxu0 0.0
    %134 = vmatpush1.msra.mxu0 0.0
    %135 = vmatprep.subr.mxu0 0.0
    %136 = vmatpush1.msra.mxu0 0.0
    %137 = vmatprep.subr.mxu0 0.0
    %138 = vmatpush1.msra.mxu0 0.0
    %139 = vmatprep.subr.mxu0 0.0
    %140 = vmatpush1.msra.mxu0 0.0
    %141 = vmatprep.subr.mxu0 0.0
    %142 = vmatpush1.msra.mxu0 0.0
    %143 = vmatprep.subr.mxu0 0.0
    %144 = vmatpush1.msra.mxu0 0.0
    %145 = vmatprep.subr.mxu0 0.0
    %146 = vmatpush1.msra.mxu0 0.0
    %147 = vmatprep.subr.mxu0 0.0
    %148 = vmatpush1.msra.mxu0 0.0
    %149 = vmatprep.subr.mxu0 0.0
    %150 = vmatpush1.msra.mxu0 0.0
    %151 = vmatprep.mubr.f32.mxu0 0.0
    %152 = vmatmul.mubr.f32.gmra.mrb[0].mxu0 %v76
    %v153 = vpop.f32.mrb[0].mxu0
    %v154 = vadd.f32 %v57, %v153
    %v155 = vpop.f32.mrb[0].mxu0
    %v156 = vadd.f32 %v57, %v155
    %157 = vmatprep.mubr.f32.mxu0 0.0
    %158 = vmatmul.mubr.f32.gmra.mrb[0].mxu0 %v79
    %v159 = vpop.f32.mrb[0].mxu0
    %v160 = vadd.f32 %v62, %v159
    %v161 = vpop.f32.mrb[0].mxu0
    %v162 = vadd.f32 %v62, %v161
    %163 = vmatprep.mubr.f32.mxu0 0.0
    %164 = vmatmul.mubr.f32.gmra.mrb[0].mxu0 %v82
    %v165 = vpop.f32.mrb[0].mxu0
    %v166 = vadd.f32 %v67, %v165
    %v167 = vpop.f32.mrb[0].mxu0
    %v168 = vadd.f32 %v67, %v167
    %169 = vmatprep.mubr.f32.mxu0 0.0
    %170 = vmatmul.mubr.f32.gmra.mrb[0].mxu0 %v85
    %v171 = vpop.f32.mrb[0].mxu0
    %v172 = vadd.f32 %v72, %v171
    %v173 = vpop.f32.mrb[0].mxu0
    %v174 = vadd.f32 %v72, %v173
    %175 = vdwg.mxu0
    %v176 = vmax.f32 %v154, 0.0
    %v177 = vmax.f32 %v156, 0.0
    %v178 = vmax.f32 %v160, 0.0
    %v179 = vmax.f32 %v162, 0.0
    %v180 = vmax.f32 %v166, 0.0
    %v181 = vmax.f32 %v168, 0.0
    %v182 = vmax.f32 %v172, 0.0
    %v183 = vmax.f32 %v174, 0.0
    %v184 = vld [vmem:[%s3] sm:$0xff]
    %v185 = vld [vmem:[%s3 + $0x8] sm:$0xff]
    %v186 = vld [vmem:[%s3 + $0x10] sm:$0xff]
    %v187 = vld [vmem:[%s3 + $0x18] sm:$0xff]
    %v188 = vld [vmem:[%s4] sm:$0xff]
    %v189 = vld [vmem:[%s4 + $0x8] sm:$0xff]
    %v190 = vld [vmem:[%s4 + $0x10] sm:$0xff]
    %v191 = vld [vmem:[%s4 + $0x18] sm:$0xff]
    %193 = vset.pattern.permute.xlu0 0
    %194 = vperm.xlu0 %193, %v188
    %v195 = vpop.permute.xlu0 %194
    %198 = vset.pattern.permute.xlu0 0
    %199 = vperm.xlu0 %198, %v189
    %v200 = vpop.permute.xlu0 %199
    %203 = vset.pattern.permute.xlu0 0
    %204 = vperm.xlu0 %203, %v190
    %v205 = vpop.permute.xlu0 %204
    %208 = vset.pattern.permute.xlu0 0
    %209 = vperm.xlu0 %208, %v191
    %v210 = vpop.permute.xlu0 %209
    %vm212 = vcmask 261120
    %v214 = vsel %vm212, %v184, 0
    %v217 = vsel %vm212, %v185, 0
    %v220 = vsel %vm212, %v186, 0
    %v223 = vsel %vm212, %v187, 0
    %225 = vmatprep.subr.mxu0 %v177
    %226 = vmatpush1.msra.mxu0 %v176
    %227 = vmatprep.subr.mxu0 %v179
    %228 = vmatpush1.msra.mxu0 %v178
    %229 = vmatprep.subr.mxu0 %v181
    %230 = vmatpush1.msra.mxu0 %v180
    %231 = vmatprep.subr.mxu0 %v183
    %232 = vmatpush1.msra.mxu0 %v182
    %233 = vmatprep.subr.mxu0 0.0
    %234 = vmatpush1.msra.mxu0 0.0
    %235 = vmatprep.subr.mxu0 0.0
    %236 = vmatpush1.msra.mxu0 0.0
    %237 = vmatprep.subr.mxu0 0.0
    %238 = vmatpush1.msra.mxu0 0.0
    %239 = vmatprep.subr.mxu0 0.0
    %240 = vmatpush1.msra.mxu0 0.0
    %241 = vmatprep.subr.mxu0 0.0
    %242 = vmatpush1.msra.mxu0 0.0
    %243 = vmatprep.subr.mxu0 0.0
    %244 = vmatpush1.msra.mxu0 0.0
    %245 = vmatprep.subr.mxu0 0.0
    %246 = vmatpush1.msra.mxu0 0.0
    %247 = vmatprep.subr.mxu0 0.0
    %248 = vmatpush1.msra.mxu0 0.0
    %249 = vmatprep.subr.mxu0 0.0
    %250 = vmatpush1.msra.mxu0 0.0
    %251 = vmatprep.subr.mxu0 0.0
    %252 = vmatpush1.msra.mxu0 0.0
    %253 = vmatprep.subr.mxu0 0.0
    %254 = vmatpush1.msra.mxu0 0.0
    %255 = vmatprep.subr.mxu0 0.0
    %256 = vmatpush1.msra.mxu0 0.0
    %257 = vmatprep.subr.mxu0 0.0
    %258 = vmatpush1.msra.mxu0 0.0
    %259 = vmatprep.subr.mxu0 0.0
    %260 = vmatpush1.msra.mxu0 0.0
    %261 = vmatprep.subr.mxu0 0.0
    %262 = vmatpush1.msra.mxu0 0.0
    %263 = vmatprep.subr.mxu0 0.0
    %264 = vmatpush1.msra.mxu0 0.0
    %265 = vmatprep.subr.mxu0 0.0
    %266 = vmatpush1.msra.mxu0 0.0
    %267 = vmatprep.subr.mxu0 0.0
    %268 = vmatpush1.msra.mxu0 0.0
    %269 = vmatprep.subr.mxu0 0.0
    %270 = vmatpush1.msra.mxu0 0.0
    %271 = vmatprep.subr.mxu0 0.0
    %272 = vmatpush1.msra.mxu0 0.0
    %273 = vmatprep.subr.mxu0 0.0
    %274 = vmatpush1.msra.mxu0 0.0
    %275 = vmatprep.subr.mxu0 0.0
    %276 = vmatpush1.msra.mxu0 0.0
    %277 = vmatprep.subr.mxu0 0.0
    %278 = vmatpush1.msra.mxu0 0.0
    %279 = vmatprep.subr.mxu0 0.0
    %280 = vmatpush1.msra.mxu0 0.0
    %281 = vmatprep.subr.mxu0 0.0
    %282 = vmatpush1.msra.mxu0 0.0
    %283 = vmatprep.subr.mxu0 0.0
    %284 = vmatpush1.msra.mxu0 0.0
    %285 = vmatprep.subr.mxu0 0.0
    %286 = vmatpush1.msra.mxu0 0.0
    %287 = vmatprep.subr.mxu0 0.0
    %288 = vmatpush1.msra.mxu0 0.0
    %289 = vmatprep.mubr.f32.mxu0 0.0
    %290 = vmatmul.mubr.f32.gmra.mrb[0].mxu0 %v214
    %v291 = vpop.f32.mrb[0].mxu0
    %v292 = vadd.f32 %v195, %v291
    %v293 = vpop.f32.mrb[0].mxu0
    %v294 = vadd.f32 %v195, %v293
    %295 = vmatprep.mubr.f32.mxu0 0.0
    %296 = vmatmul.mubr.f32.gmra.mrb[0].mxu0 %v217
    %v297 = vpop.f32.mrb[0].mxu0
    %v298 = vadd.f32 %v200, %v297
    %v299 = vpop.f32.mrb[0].mxu0
    %v300 = vadd.f32 %v200, %v299
    %301 = vmatprep.mubr.f32.mxu0 0.0
    %302 = vmatmul.mubr.f32.gmra.mrb[0].mxu0 %v220
    %v303 = vpop.f32.mrb[0].mxu0
    %v304 = vadd.f32 %v205, %v303
    %v305 = vpop.f32.mrb[0].mxu0
    %v306 = vadd.f32 %v205, %v305
    %307 = vmatprep.mubr.f32.mxu0 0.0
    %308 = vmatmul.mubr.f32.gmra.mrb[0].mxu0 %v223
    %v309 = vpop.f32.mrb[0].mxu0
    %v310 = vadd.f32 %v210, %v309
    %v311 = vpop.f32.mrb[0].mxu0
    %v312 = vadd.f32 %v210, %v311
    %313 = vdwg.mxu0
    %v314 = vmax.f32 %v292, 0.0
    %v315 = vmax.f32 %v294, 0.0
    %v316 = vmax.f32 %v298, 0.0
    %v317 = vmax.f32 %v300, 0.0
    %v318 = vmax.f32 %v304, 0.0
    %v319 = vmax.f32 %v306, 0.0
    %v320 = vmax.f32 %v310, 0.0
    %v321 = vmax.f32 %v312, 0.0
    %v322 = vld [vmem:[%s5] sm:$0xff]
    %v323 = vld [vmem:[%s5 + $0x8] sm:$0xff]
    %v324 = vld [vmem:[%s5 + $0x10] sm:$0xff]
    %v325 = vld [vmem:[%s5 + $0x18] sm:$0xff]
    %v326 = vld [vmem:[%s6] sm:$0xff]
    %v327 = vld [vmem:[%s6 + $0x8] sm:$0xff]
    %v328 = vld [vmem:[%s6 + $0x10] sm:$0xff]
    %v329 = vld [vmem:[%s6 + $0x18] sm:$0xff]
    %331 = vset.pattern.permute.xlu0 0
    %332 = vperm.xlu0 %331, %v326
    %v333 = vpop.permute.xlu0 %332
    %336 = vset.pattern.permute.xlu0 0
    %337 = vperm.xlu0 %336, %v327
    %v338 = vpop.permute.xlu0 %337
    %341 = vset.pattern.permute.xlu0 0
    %342 = vperm.xlu0 %341, %v328
    %v343 = vpop.permute.xlu0 %342
    %346 = vset.pattern.permute.xlu0 0
    %347 = vperm.xlu0 %346, %v329
    %v348 = vpop.permute.xlu0 %347
    %v351 = vsel %vm212, %v322, 0
    %v354 = vsel %vm212, %v323, 0
    %v357 = vsel %vm212, %v324, 0
    %v360 = vsel %vm212, %v325, 0
    %362 = vmatprep.subr.mxu0 %v315
    %363 = vmatpush1.msra.mxu0 %v314
    %364 = vmatprep.subr.mxu0 %v317
    %365 = vmatpush1.msra.mxu0 %v316
    %366 = vmatprep.subr.mxu0 %v319
    %367 = vmatpush1.msra.mxu0 %v318
    %368 = vmatprep.subr.mxu0 %v321
    %369 = vmatpush1.msra.mxu0 %v320
    %370 = vmatprep.subr.mxu0 0.0
    %371 = vmatpush1.msra.mxu0 0.0
    %372 = vmatprep.subr.mxu0 0.0
    %373 = vmatpush1.msra.mxu0 0.0
    %374 = vmatprep.subr.mxu0 0.0
    %375 = vmatpush1.msra.mxu0 0.0
    %376 = vmatprep.subr.mxu0 0.0
    %377 = vmatpush1.msra.mxu0 0.0
    %378 = vmatprep.subr.mxu0 0.0
    %379 = vmatpush1.msra.mxu0 0.0
    %380 = vmatprep.subr.mxu0 0.0
    %381 = vmatpush1.msra.mxu0 0.0
    %382 = vmatprep.subr.mxu0 0.0
    %383 = vmatpush1.msra.mxu0 0.0
    %384 = vmatprep.subr.mxu0 0.0
    %385 = vmatpush1.msra.mxu0 0.0
    %386 = vmatprep.subr.mxu0 0.0
    %387 = vmatpush1.msra.mxu0 0.0
    %388 = vmatprep.subr.mxu0 0.0
    %389 = vmatpush1.msra.mxu0 0.0
    %390 = vmatprep.subr.mxu0 0.0
    %391 = vmatpush1.msra.mxu0 0.0
    %392 = vmatprep.subr.mxu0 0.0
    %393 = vmatpush1.msra.mxu0 0.0
    %394 = vmatprep.subr.mxu0 0.0
    %395 = vmatpush1.msra.mxu0 0.0
    %396 = vmatprep.subr.mxu0 0.0
    %397 = vmatpush1.msra.mxu0 0.0
    %398 = vmatprep.subr.mxu0 0.0
    %399 = vmatpush1.msra.mxu0 0.0
    %400 = vmatprep.subr.mxu0 0.0
    %401 = vmatpush1.msra.mxu0 0.0
    %402 = vmatprep.subr.mxu0 0.0
    %403 = vmatpush1.msra.mxu0 0.0
    %404 = vmatprep.subr.mxu0 0.0
    %405 = vmatpush1.msra.mxu0 0.0
    %406 = vmatprep.subr.mxu0 0.0
    %407 = vmatpush1.msra.mxu0 0.0
    %408 = vmatprep.subr.mxu0 0.0
    %409 = vmatpush1.msra.mxu0 0.0
    %410 = vmatprep.subr.mxu0 0.0
    %411 = vmatpush1.msra.mxu0 0.0
    %412 = vmatprep.subr.mxu0 0.0
    %413 = vmatpush1.msra.mxu0 0.0
    %414 = vmatprep.subr.mxu0 0.0
    %415 = vmatpush1.msra.mxu0 0.0
    %416 = vmatprep.subr.mxu0 0.0
    %417 = vmatpush1.msra.mxu0 0.0
    %418 = vmatprep.subr.mxu0 0.0
    %419 = vmatpush1.msra.mxu0 0.0
    %420 = vmatprep.subr.mxu0 0.0
    %421 = vmatpush1.msra.mxu0 0.0
    %422 = vmatprep.subr.mxu0 0.0
    %423 = vmatpush1.msra.mxu0 0.0
    %424 = vmatprep.subr.mxu0 0.0
    %425 = vmatpush1.msra.mxu0 0.0
    %426 = vmatprep.mubr.f32.mxu0 0.0
    %427 = vmatmul.mubr.f32.gmra.mrb[0].mxu0 %v351
    %v428 = vpop.f32.mrb[0].mxu0
    %v429 = vadd.f32 %v333, %v428
    %v430 = vpop.f32.mrb[0].mxu0
    %v431 = vadd.f32 %v333, %v430
    %432 = vmatprep.mubr.f32.mxu0 0.0
    %433 = vmatmul.mubr.f32.gmra.mrb[0].mxu0 %v354
    %v434 = vpop.f32.mrb[0].mxu0
    %v435 = vadd.f32 %v338, %v434
    %v436 = vpop.f32.mrb[0].mxu0
    %v437 = vadd.f32 %v338, %v436
    %438 = vmatprep.mubr.f32.mxu0 0.0
    %439 = vmatmul.mubr.f32.gmra.mrb[0].mxu0 %v357
    %v440 = vpop.f32.mrb[0].mxu0
    %v441 = vadd.f32 %v343, %v440
    %v442 = vpop.f32.mrb[0].mxu0
    %v443 = vadd.f32 %v343, %v442
    %444 = vmatprep.mubr.f32.mxu0 0.0
    %445 = vmatmul.mubr.f32.gmra.mrb[0].mxu0 %v360
    %v446 = vpop.f32.mrb[0].mxu0
    %v447 = vadd.f32 %v348, %v446
    %v448 = vpop.f32.mrb[0].mxu0
    %v449 = vadd.f32 %v348, %v448
    %450 = vdwg.mxu0
    %v451 = vmax.f32 %v429, 0.0
    %v452 = vmax.f32 %v431, 0.0
    %v453 = vmax.f32 %v435, 0.0
    %v454 = vmax.f32 %v437, 0.0
    %v455 = vmax.f32 %v441, 0.0
    %v456 = vmax.f32 %v443, 0.0
    %v457 = vmax.f32 %v447, 0.0
    %v458 = vmax.f32 %v449, 0.0
    %v459 = vld [vmem:[%s7] sm:$0xff]
    %v460 = vld [vmem:[%s7 + $0x8] sm:$0xff]
    %v461 = vld [vmem:[%s7 + $0x10] sm:$0xff]
    %v462 = vld [vmem:[%s7 + $0x18] sm:$0xff]
    %v463 = vld [vmem:[%s8] sm:$0xff]
    %v464 = vld [vmem:[%s8 + $0x8] sm:$0xff]
    %v465 = vld [vmem:[%s8 + $0x10] sm:$0xff]
    %v466 = vld [vmem:[%s8 + $0x18] sm:$0xff]
    %468 = vset.pattern.permute.xlu0 0
    %469 = vperm.xlu0 %468, %v463
    %v470 = vpop.permute.xlu0 %469
    %473 = vset.pattern.permute.xlu0 0
    %474 = vperm.xlu0 %473, %v464
    %v475 = vpop.permute.xlu0 %474
    %478 = vset.pattern.permute.xlu0 0
    %479 = vperm.xlu0 %478, %v465
    %v480 = vpop.permute.xlu0 %479
    %483 = vset.pattern.permute.xlu0 0
    %484 = vperm.xlu0 %483, %v466
    %v485 = vpop.permute.xlu0 %484
    %v488 = vsel %vm212, %v459, 0
    %v491 = vsel %vm212, %v460, 0
    %v494 = vsel %vm212, %v461, 0
    %v497 = vsel %vm212, %v462, 0
    %499 = vmatprep.subr.mxu0 %v452
    %500 = vmatpush1.msra.mxu0 %v451
    %501 = vmatprep.subr.mxu0 %v454
    %502 = vmatpush1.msra.mxu0 %v453
    %503 = vmatprep.subr.mxu0 %v456
    %504 = vmatpush1.msra.mxu0 %v455
    %505 = vmatprep.subr.mxu0 %v458
    %506 = vmatpush1.msra.mxu0 %v457
    %507 = vmatprep.subr.mxu0 0.0
    %508 = vmatpush1.msra.mxu0 0.0
    %509 = vmatprep.subr.mxu0 0.0
    %510 = vmatpush1.msra.mxu0 0.0
    %511 = vmatprep.subr.mxu0 0.0
    %512 = vmatpush1.msra.mxu0 0.0
    %513 = vmatprep.subr.mxu0 0.0
    %514 = vmatpush1.msra.mxu0 0.0
    %515 = vmatprep.subr.mxu0 0.0
    %516 = vmatpush1.msra.mxu0 0.0
    %517 = vmatprep.subr.mxu0 0.0
    %518 = vmatpush1.msra.mxu0 0.0
    %519 = vmatprep.subr.mxu0 0.0
    %520 = vmatpush1.msra.mxu0 0.0
    %521 = vmatprep.subr.mxu0 0.0
    %522 = vmatpush1.msra.mxu0 0.0
    %523 = vmatprep.subr.mxu0 0.0
    %524 = vmatpush1.msra.mxu0 0.0
    %525 = vmatprep.subr.mxu0 0.0
    %526 = vmatpush1.msra.mxu0 0.0
    %527 = vmatprep.subr.mxu0 0.0
    %528 = vmatpush1.msra.mxu0 0.0
    %529 = vmatprep.subr.mxu0 0.0
    %530 = vmatpush1.msra.mxu0 0.0
    %531 = vmatprep.subr.mxu0 0.0
    %532 = vmatpush1.msra.mxu0 0.0
    %533 = vmatprep.subr.mxu0 0.0
    %534 = vmatpush1.msra.mxu0 0.0
    %535 = vmatprep.subr.mxu0 0.0
    %536 = vmatpush1.msra.mxu0 0.0
    %537 = vmatprep.subr.mxu0 0.0
    %538 = vmatpush1.msra.mxu0 0.0
    %539 = vmatprep.subr.mxu0 0.0
    %540 = vmatpush1.msra.mxu0 0.0
    %541 = vmatprep.subr.mxu0 0.0
    %542 = vmatpush1.msra.mxu0 0.0
    %543 = vmatprep.subr.mxu0 0.0
    %544 = vmatpush1.msra.mxu0 0.0
    %545 = vmatprep.subr.mxu0 0.0
    %546 = vmatpush1.msra.mxu0 0.0
    %547 = vmatprep.subr.mxu0 0.0
    %548 = vmatpush1.msra.mxu0 0.0
    %549 = vmatprep.subr.mxu0 0.0
    %550 = vmatpush1.msra.mxu0 0.0
    %551 = vmatprep.subr.mxu0 0.0
    %552 = vmatpush1.msra.mxu0 0.0
    %553 = vmatprep.subr.mxu0 0.0
    %554 = vmatpush1.msra.mxu0 0.0
    %555 = vmatprep.subr.mxu0 0.0
    %556 = vmatpush1.msra.mxu0 0.0
    %557 = vmatprep.subr.mxu0 0.0
    %558 = vmatpush1.msra.mxu0 0.0
    %559 = vmatprep.subr.mxu0 0.0
    %560 = vmatpush1.msra.mxu0 0.0
    %561 = vmatprep.subr.mxu0 0.0
    %562 = vmatpush1.msra.mxu0 0.0
    %563 = vmatprep.mubr.f32.mxu0 0.0
    %564 = vmatmul.mubr.f32.gmra.mrb[0].mxu0 %v488
    %v565 = vpop.f32.mrb[0].mxu0
    %v566 = vadd.f32 %v470, %v565
    %v567 = vpop.f32.mrb[0].mxu0
    %v568 = vadd.f32 %v470, %v567
    %569 = vmatprep.mubr.f32.mxu0 0.0
    %570 = vmatmul.mubr.f32.gmra.mrb[0].mxu0 %v491
    %v571 = vpop.f32.mrb[0].mxu0
    %v572 = vadd.f32 %v475, %v571
    %v573 = vpop.f32.mrb[0].mxu0
    %v574 = vadd.f32 %v475, %v573
    %575 = vmatprep.mubr.f32.mxu0 0.0
    %576 = vmatmul.mubr.f32.gmra.mrb[0].mxu0 %v494
    %v577 = vpop.f32.mrb[0].mxu0
    %v578 = vadd.f32 %v480, %v577
    %v579 = vpop.f32.mrb[0].mxu0
    %v580 = vadd.f32 %v480, %v579
    %581 = vmatprep.mubr.f32.mxu0 0.0
    %582 = vmatmul.mubr.f32.gmra.mrb[0].mxu0 %v497
    %v583 = vpop.f32.mrb[0].mxu0
    %v584 = vadd.f32 %v485, %v583
    %v585 = vpop.f32.mrb[0].mxu0
    %v586 = vadd.f32 %v485, %v585
    %587 = vdwg.mxu0
    %v588 = vmax.f32 %v566, 0.0
    %v589 = vmax.f32 %v568, 0.0
    %v590 = vmax.f32 %v572, 0.0
    %v591 = vmax.f32 %v574, 0.0
    %v592 = vmax.f32 %v578, 0.0
    %v593 = vmax.f32 %v580, 0.0
    %v594 = vmax.f32 %v584, 0.0
    %v595 = vmax.f32 %v586, 0.0
    %v596 = vld [vmem:[%s9] sm:$0xff]
    %v597 = vld [vmem:[%s9 + $0x8] sm:$0xff]
    %v598 = vld [vmem:[%s9 + $0x10] sm:$0xff]
    %v599 = vld [vmem:[%s10] sm:$0xff]
    %v600 = vld [vmem:[%s10 + $0x8] sm:$0xff]
    %v601 = vld [vmem:[%s10 + $0x10] sm:$0xff]
    %603 = vset.pattern.permute.xlu0 0
    %604 = vperm.xlu0 %603, %v599
    %v605 = vpop.permute.xlu0 %604
    %608 = vset.pattern.permute.xlu0 0
    %609 = vperm.xlu0 %608, %v600
    %v610 = vpop.permute.xlu0 %609
    %613 = vset.pattern.permute.xlu0 0
    %614 = vperm.xlu0 %613, %v601
    %v615 = vpop.permute.xlu0 %614
    %v618 = vsel %vm212, %v596, 0
    %v621 = vsel %vm212, %v597, 0
    %v624 = vsel %vm212, %v598, 0
    %626 = vmatprep.subr.mxu0 %v589
    %627 = vmatpush1.msra.mxu0 %v588
    %628 = vmatprep.subr.mxu0 %v591
    %629 = vmatpush1.msra.mxu0 %v590
    %630 = vmatprep.subr.mxu0 %v593
    %631 = vmatpush1.msra.mxu0 %v592
    %632 = vmatprep.subr.mxu0 %v595
    %633 = vmatpush1.msra.mxu0 %v594
    %634 = vmatprep.subr.mxu0 0.0
    %635 = vmatpush1.msra.mxu0 0.0
    %636 = vmatprep.subr.mxu0 0.0
    %637 = vmatpush1.msra.mxu0 0.0
    %638 = vmatprep.subr.mxu0 0.0
    %639 = vmatpush1.msra.mxu0 0.0
    %640 = vmatprep.subr.mxu0 0.0
    %641 = vmatpush1.msra.mxu0 0.0
    %642 = vmatprep.subr.mxu0 0.0
    %643 = vmatpush1.msra.mxu0 0.0
    %644 = vmatprep.subr.mxu0 0.0
    %645 = vmatpush1.msra.mxu0 0.0
    %646 = vmatprep.subr.mxu0 0.0
    %647 = vmatpush1.msra.mxu0 0.0
    %648 = vmatprep.subr.mxu0 0.0
    %649 = vmatpush1.msra.mxu0 0.0
    %650 = vmatprep.subr.mxu0 0.0
    %651 = vmatpush1.msra.mxu0 0.0
    %652 = vmatprep.subr.mxu0 0.0
    %653 = vmatpush1.msra.mxu0 0.0
    %654 = vmatprep.subr.mxu0 0.0
    %655 = vmatpush1.msra.mxu0 0.0
    %656 = vmatprep.subr.mxu0 0.0
    %657 = vmatpush1.msra.mxu0 0.0
    %658 = vmatprep.subr.mxu0 0.0
    %659 = vmatpush1.msra.mxu0 0.0
    %660 = vmatprep.subr.mxu0 0.0
    %661 = vmatpush1.msra.mxu0 0.0
    %662 = vmatprep.subr.mxu0 0.0
    %663 = vmatpush1.msra.mxu0 0.0
    %664 = vmatprep.subr.mxu0 0.0
    %665 = vmatpush1.msra.mxu0 0.0
    %666 = vmatprep.subr.mxu0 0.0
    %667 = vmatpush1.msra.mxu0 0.0
    %668 = vmatprep.subr.mxu0 0.0
    %669 = vmatpush1.msra.mxu0 0.0
    %670 = vmatprep.subr.mxu0 0.0
    %671 = vmatpush1.msra.mxu0 0.0
    %672 = vmatprep.subr.mxu0 0.0
    %673 = vmatpush1.msra.mxu0 0.0
    %674 = vmatprep.subr.mxu0 0.0
    %675 = vmatpush1.msra.mxu0 0.0
    %676 = vmatprep.subr.mxu0 0.0
    %677 = vmatpush1.msra.mxu0 0.0
    %678 = vmatprep.subr.mxu0 0.0
    %679 = vmatpush1.msra.mxu0 0.0
    %680 = vmatprep.subr.mxu0 0.0
    %681 = vmatpush1.msra.mxu0 0.0
    %682 = vmatprep.subr.mxu0 0.0
    %683 = vmatpush1.msra.mxu0 0.0
    %684 = vmatprep.subr.mxu0 0.0
    %685 = vmatpush1.msra.mxu0 0.0
    %686 = vmatprep.subr.mxu0 0.0
    %687 = vmatpush1.msra.mxu0 0.0
    %688 = vmatprep.subr.mxu0 0.0
    %689 = vmatpush1.msra.mxu0 0.0
    %690 = vmatprep.mubr.f32.mxu0 0.0
    %691 = vmatmul.mubr.f32.gmra.mrb[0].mxu0 %v618
    %v692 = vpop.f32.mrb[0].mxu0
    %v693 = vadd.f32 %v605, %v692
    %v694 = vpop.f32.mrb[0].mxu0
    %v695 = vadd.f32 %v605, %v694
    %696 = vmatprep.mubr.f32.mxu0 0.0
    %697 = vmatmul.mubr.f32.gmra.mrb[0].mxu0 %v621
    %v698 = vpop.f32.mrb[0].mxu0
    %v699 = vadd.f32 %v610, %v698
    %v700 = vpop.f32.mrb[0].mxu0
    %v701 = vadd.f32 %v610, %v700
    %702 = vmatprep.mubr.f32.mxu0 0.0
    %703 = vmatmul.mubr.f32.gmra.mrb[0].mxu0 %v624
    %v704 = vpop.f32.mrb[0].mxu0
    %v705 = vadd.f32 %v615, %v704
    %v706 = vpop.f32.mrb[0].mxu0
    %v707 = vadd.f32 %v615, %v706
    %708 = vdwg.mxu0
    %709 = vst [vmem:[#allocation2] sm:$0xff] %v693
    %710 = vst [vmem:[#allocation2 + $0x8] sm:$0xff] %v695
    %711 = vst [vmem:[#allocation2 + $0x10] sm:$0xff] %v699
    %712 = vst [vmem:[#allocation2 + $0x18] sm:$0xff] %v701
    %713 = vst [vmem:[#allocation4] sm:$0xff] %v705
    %714 = vst [vmem:[#allocation4 + $0x8] sm:$0xff] %v707
    // Predicated region
    $region46: #{tpu_custom_call.1} parent=1 // pred_check
      _
    $region47: #{tpu_custom_call.1} parent=1 // pred_check_branch
      %716 = sbr.rel (0) target = $region49
    $region48: #{tpu_custom_call.1} parent=1 // pred_region
      %s718 = ssub.s32 512, 512
      %719 = vsyncadd [#allocation3], %s718
      %s720 = sshll.u32 [#allocation2], 4
      %s721 = int_to_ptr.vmem [resolvable:$true] %s720
      %726 = dma.vmem_to_hbm [thread:$0]  %s721, 512, %s11, [#allocation3], 256, 256, 16
    $region49: #{tpu_custom_call.1} parent=1 // pred_fallthru
      _
    // Predicated region
    $region50: #{tpu_custom_call.1} parent=1 // pred_check
      _
    $region51: #{tpu_custom_call.1} parent=1 // pred_check_branch
      %728 = sbr.rel (0) target = $region53
    $region52: #{tpu_custom_call.1} parent=1 // pred_region
      %s730 = ssub.s32 256, 256
      %731 = vsyncadd [#allocation5], %s730
      %s733 = sshll.u32 [#allocation4], 4
      %s734 = int_to_ptr.vmem [resolvable:$true] %s733
      %736 = dma.vmem_to_hbm [thread:$0]  %s734, 256, %s12, [#allocation5]
    $region53: #{tpu_custom_call.1} parent=1 // pred_fallthru
      _
    // Predicated region
    $region54: #{tpu_custom_call.1} parent=1 // pred_check
      _
    $region55: #{tpu_custom_call.1} parent=1 // pred_check_branch
      %738 = sbr.rel (0) target = $region57
    $region56: #{tpu_custom_call.1} parent=1 // pred_region
      %739 = dma.done [#allocation3], 512
    $region57: #{tpu_custom_call.1} parent=1 // pred_fallthru
      _
    // Predicated region
    $region58: #{tpu_custom_call.1} parent=1 // pred_check
      _
    $region59: #{tpu_custom_call.1} parent=1 // pred_check_branch
      %741 = sbr.rel (0) target = $region61
    $region60: #{tpu_custom_call.1} parent=1 // pred_region
      %742 = dma.done [#allocation5], 256
    $region61: #{tpu_custom_call.1} parent=1 // pred_fallthru
      _
    %743 = vsyncpa [#allocation3], 1
    %744 = vsyncpa [#allocation5], 1

</llo_original>
